<compile_context>
chip_gen: v7x
topology: tpu7x:2x2x1
jax: 0.10.0
libtpu: 0.0.40
codegen_flags: <defaults>
</compile_context>

<pallas_src>
import functools

import jax
import jax.numpy as jnp
from jax.experimental import pallas as pl
from jax.experimental.pallas import tpu as pltpu

LANE = 128            # final-layer logits padded to a full lane width
NEG_BIG = -1e30       # bias for padded logit lanes: never wins argmax/softmax
MAX_TILE_B = 2048     # max rows per batch tile (VMEM footprint stays tiny)


def _elu(h):
    # ELU, alpha=1.0 (torch.nn.ELU default); exp() runs on the EUP slot.
    return jnp.where(h > 0, h, jnp.exp(jnp.minimum(h, 0.0)) - 1.0)


def _mlp_logits(x_ref, w1_ref, b1_ref, w2_ref, b2_ref, w3_ref, b3_ref):
    """f32 end-to-end (matches the PyTorch reference numerics)."""
    h = jnp.dot(x_ref[...], w1_ref[...],
                preferred_element_type=jnp.float32) + b1_ref[...]
    h = _elu(h)
    h = jnp.dot(h, w2_ref[...],
                preferred_element_type=jnp.float32) + b2_ref[...]
    h = _elu(h)
    # Last layer is padded to LANE output columns (padding logits == NEG_BIG).
    return jnp.dot(h, w3_ref[...],
                   preferred_element_type=jnp.float32) + b3_ref[...]


def _eval_kernel(x_ref, w1_ref, b1_ref, w2_ref, b2_ref, w3_ref, b3_ref,
                 rowmax_ref, rowarg_ref):
    """Per-row max logit + first-occurrence argmax, stored lane-dense."""
    logits = _mlp_logits(x_ref, w1_ref, b1_ref, w2_ref, b2_ref, w3_ref, b3_ref)
    lane = jax.lax.broadcasted_iota(jnp.int32, logits.shape, 1)
    maxv = jnp.max(logits, axis=-1, keepdims=True)                  # (tile_b, 1)
    first = jnp.min(jnp.where(logits == maxv, lane, LANE),
                    axis=-1, keepdims=True)                         # (tile_b, 1)
    rowmax_ref[...] = maxv.reshape(1, -1)                           # (1, tile_b)
    rowarg_ref[...] = first.reshape(1, -1)


def _train_kernel(x_ref, g_ref, w1_ref, b1_ref, w2_ref, b2_ref, w3_ref, b3_ref,
                  action_ref, logprob_ref):
    """Gumbel-max categorical sample + log_prob, stored lane-dense."""
    logits = _mlp_logits(x_ref, w1_ref, b1_ref, w2_ref, b2_ref, w3_ref, b3_ref)
    lane = jax.lax.broadcasted_iota(jnp.int32, logits.shape, 1)

    # Gumbel-max sampling; noise is host-generated (tiling-invariant).  Padded
    # lanes keep their ~-1e30 logits so noise there never wins.
    perturbed = logits + g_ref[...]
    pmax = jnp.max(perturbed, axis=-1, keepdims=True)
    action = jnp.min(jnp.where(perturbed == pmax, lane, LANE),
                     axis=-1, keepdims=True)                        # (tile_b, 1)

    # log_softmax; padded lanes contribute exp(NEG_BIG - max) == 0.
    lmax = jnp.max(logits, axis=-1, keepdims=True)
    shifted = logits - lmax
    lse = jnp.log(jnp.sum(jnp.exp(shifted), axis=-1, keepdims=True))
    log_probs = shifted - lse
    lp = jnp.sum(jnp.where(lane == action, log_probs, 0.0),
                 axis=-1, keepdims=True)                            # (tile_b, 1)

    action_ref[...] = action.reshape(1, -1)                         # (1, tile_b)
    logprob_ref[...] = lp.reshape(1, -1)


def _round_up(n, m):
    return ((n + m - 1) // m) * m


def _choose_tiling(batch):
    """Pick rows-per-tile and grid length; >=2 tiles for big batches (v7x)."""
    num_tiles = pl.cdiv(batch, MAX_TILE_B)
    if num_tiles == 1 and batch >= 1024:
        num_tiles = 2                       # let both v7x TensorCores work
    tile_b = _round_up(pl.cdiv(batch, num_tiles), 8)
    num_tiles = pl.cdiv(batch, tile_b)
    return tile_b, num_tiles


def init_params(key, layer_sizes):
    """Deterministic init mimicking nn.Linear (uniform +-1/sqrt(fan_in))."""
    params = []
    for fan_in, fan_out in zip(layer_sizes[:-1], layer_sizes[1:]):
        key, kw, kb = jax.random.split(key, 3)
        bound = 1.0 / float(fan_in) ** 0.5
        w = jax.random.uniform(kw, (fan_in, fan_out), jnp.float32,
                               minval=-bound, maxval=bound)   # (in, out) layout
        b = jax.random.uniform(kb, (1, fan_out), jnp.float32,
                               minval=-bound, maxval=bound)
        params.extend([w, b])
    return tuple(params)


def prepare_params(params):
    """Kernel-ready params: f32 throughout, last layer lane-padded to 128."""
    w1, b1, w2, b2, w3, b3 = params
    n_actions = w3.shape[1]
    w3p = jnp.zeros((w3.shape[0], LANE), jnp.float32).at[:, :n_actions].set(w3)
    b3p = jnp.full((1, LANE), NEG_BIG, jnp.float32).at[:, :n_actions].set(b3)
    return (w1, b1, w2, b2, w3p, b3p)


@functools.partial(jax.jit, static_argnames=("n_actions", "training"))
def policy_forward(x, kparams, *, n_actions, training, key=None):
    w1, b1, w2, b2, w3p, b3p = kparams
    single = (x.ndim == 1)
    if single:
        x = x[None, :]
    batch, feat = x.shape
    h1, h2 = w1.shape[1], w2.shape[1]

    tile_b, num_tiles = _choose_tiling(batch)
    grid = (num_tiles,)

    x_spec = pl.BlockSpec((tile_b, feat), lambda i: (i, 0))
    w_specs = [pl.BlockSpec(p.shape, lambda i: (0, 0))           # resident weights
               for p in (w1, b1, w2, b2, w3p, b3p)]
    out_spec = pl.BlockSpec((1, tile_b), lambda i: (i, 0))       # lane-dense rows
    out_struct = lambda dt: jax.ShapeDtypeStruct((num_tiles, tile_b), dt)
    cparams = pltpu.CompilerParams(dimension_semantics=("parallel",))

    flops = 2 * batch * (feat * h1 + h1 * h2 + h2 * LANE)
    trans = batch * (h1 + h2) + (batch * LANE if training else 0)
    bytes_accessed = 4 * (x.size + sum(int(p.size) for p in kparams)
                          + 2 * num_tiles * tile_b
                          + (batch * LANE if training else 0))
    cost = pl.CostEstimate(flops=flops, transcendentals=trans,
                           bytes_accessed=bytes_accessed)

    if not training:
        rowmax, rowarg = pl.pallas_call(
            _eval_kernel,
            grid=grid,
            in_specs=[x_spec] + w_specs,
            out_specs=(out_spec, out_spec),
            out_shape=(out_struct(jnp.float32), out_struct(jnp.int32)),
            compiler_params=cparams,
            cost_estimate=cost,
        )(x, w1, b1, w2, b2, w3p, b3p)
        # Drop ragged-tile padding rows (they are at the tail of the flat slab).
        rowmax = rowmax.reshape(-1)[:batch]
        rowarg = rowarg.reshape(-1)[:batch]
        # PyTorch eval returns logits.argmax() over the *flattened* tensor.
        # TODO(synk): cross-tile argmax could be fused in-kernel with an SMEM
        # accumulator, at the cost of an "arbitrary" grid axis.
        best_row = jnp.argmax(rowmax)
        return best_row * n_actions + rowarg[best_row]

    if key is None:
        raise ValueError("training=True requires a PRNG key")
    # Host-side Gumbel noise: pltpu.prng_* has no interpret/CPU lowering, and
    # host-side generation makes sampling independent of the batch tiling.
    gumbel = jax.random.gumbel(key, (batch, LANE), jnp.float32)
    g_spec = pl.BlockSpec((tile_b, LANE), lambda i: (i, 0))

    action, log_prob = pl.pallas_call(
        _train_kernel,
        grid=grid,
        in_specs=[x_spec, g_spec] + w_specs,
        out_specs=(out_spec, out_spec),
        out_shape=(out_struct(jnp.int32), out_struct(jnp.float32)),
        compiler_params=cparams,
        cost_estimate=cost,
    )(x, gumbel, w1, b1, w2, b2, w3p, b3p)
    action = action.reshape(-1)[:batch]
    log_prob = log_prob.reshape(-1)[:batch]
    if single:
        return action[0], log_prob[0]
    return action, log_prob


if __name__ == "__main__":
    key = jax.random.PRNGKey(0)
    k_params, k_x, k_sample = jax.random.split(key, 3)

    layer_sizes = [16, 32, 32, 4]   # obs_dim=16, two hidden layers of 32, 4 actions
    batch = 2
    n_actions = layer_sizes[-1]

    raw_params = init_params(k_params, layer_sizes)
    kparams = prepare_params(raw_params)
    x = jax.random.normal(k_x, (batch, layer_sizes[0]), jnp.float32)

    # Pure-JAX reference logits for sanity checks.
    w1, b1, w2, b2, w3, b3 = raw_params
    ref_logits = jax.nn.elu(x @ w1 + b1)
    ref_logits = jax.nn.elu(ref_logits @ w2 + b2)
    ref_logits = ref_logits @ w3 + b3

    # eval path: greedy action (flattened argmax over logits, like the PyTorch spec)
    greedy = policy_forward(x, kparams, n_actions=n_actions, training=False)
    greedy = jax.block_until_ready(greedy)
    flat = ref_logits.reshape(-1)
    assert float(flat[greedy]) >= float(flat.max()) - 1e-3

    # training path: fused Gumbel-max categorical sample + log_prob
    action, log_prob = policy_forward(x, kparams, n_actions=n_actions,
                                      training=True, key=k_sample)
    action, log_prob = jax.block_until_ready((action, log_prob))
    assert action.shape == (batch,) and log_prob.shape == (batch,)
    assert bool(jnp.all((action >= 0) & (action < n_actions)))
    ref_lp = jax.nn.log_softmax(ref_logits, axis=-1)[jnp.arange(batch), action]
    assert bool(jnp.allclose(log_prob, ref_lp, atol=2e-3)), (log_prob, ref_lp)

    print("KERNEL_OK")
</pallas_src>

<mosaic_0001>
module attributes {stable_mosaic.version = 11 : i64} {
  func.func @_eval_kernel(%arg0: i32, %arg1: memref<8x16xf32, #tpu.memory_space<vmem>>, %arg2: memref<16x32xf32, #tpu.memory_space<vmem>>, %arg3: memref<1x32xf32, #tpu.memory_space<vmem>>, %arg4: memref<32x32xf32, #tpu.memory_space<vmem>>, %arg5: memref<1x32xf32, #tpu.memory_space<vmem>>, %arg6: memref<32x128xf32, #tpu.memory_space<vmem>>, %arg7: memref<1x128xf32, #tpu.memory_space<vmem>>, %arg8: memref<1x8xf32, #tpu.memory_space<vmem>>, %arg9: memref<1x8xi32, #tpu.memory_space<vmem>>) attributes {dimension_semantics = [#tpu.dimension_semantics<parallel>], iteration_bounds = array<i64: 1>, scalar_prefetch = 0 : i64, scratch_operands = 0 : i64, tpu.core_type = #tpu.core_type<tc>, window_params = [{transform_indices = @transform_0, window_bounds = array<i64: 8, 16>}, {pipeline_mode = #tpu.pipeline_mode<synchronous>, transform_indices = @transform_1, window_bounds = array<i64: 16, 32>}, {pipeline_mode = #tpu.pipeline_mode<synchronous>, transform_indices = @transform_2, window_bounds = array<i64: 1, 32>}, {pipeline_mode = #tpu.pipeline_mode<synchronous>, transform_indices = @transform_3, window_bounds = array<i64: 32, 32>}, {pipeline_mode = #tpu.pipeline_mode<synchronous>, transform_indices = @transform_4, window_bounds = array<i64: 1, 32>}, {pipeline_mode = #tpu.pipeline_mode<synchronous>, transform_indices = @transform_5, window_bounds = array<i64: 32, 128>}, {pipeline_mode = #tpu.pipeline_mode<synchronous>, transform_indices = @transform_6, window_bounds = array<i64: 1, 128>}, {transform_indices = @transform_7, window_bounds = array<i64: 1, 8>}, {transform_indices = @transform_8, window_bounds = array<i64: 1, 8>}]} {
    %c0 = arith.constant 0 : index
    %c0_0 = arith.constant 0 : index
    %0 = vector.load %arg1[%c0, %c0_0] : memref<8x16xf32, #tpu.memory_space<vmem>>, vector<8x16xf32>
    %c0_1 = arith.constant 0 : index
    %c0_2 = arith.constant 0 : index
    %1 = vector.load %arg2[%c0_1, %c0_2] : memref<16x32xf32, #tpu.memory_space<vmem>>, vector<16x32xf32>
    %cst = arith.constant dense<0.000000e+00> : vector<8x32xf32>
    %2 = tpu.matmul %0, %1, %cst {dimension_numbers = #tpu.dot_dimension_numbers<[1], [0], [0], [1], [0, 0, 1, 1], [], []>} : vector<8x16xf32>, vector<16x32xf32>, vector<8x32xf32> -> vector<8x32xf32>
    %c0_3 = arith.constant 0 : index
    %c0_4 = arith.constant 0 : index
    %3 = vector.load %arg3[%c0_3, %c0_4] : memref<1x32xf32, #tpu.memory_space<vmem>>, vector<1x32xf32>
    %4 = vector.broadcast %3 : vector<1x32xf32> to vector<8x32xf32>
    %5 = arith.addf %2, %4 : vector<8x32xf32>
    %cst_5 = arith.constant 0.000000e+00 : f32
    %6 = vector.broadcast %cst_5 : f32 to vector<8x32xf32>
    %7 = arith.cmpf ogt, %5, %6 : vector<8x32xf32>
    %cst_6 = arith.constant 0.000000e+00 : f32
    %8 = vector.broadcast %cst_6 : f32 to vector<8x32xf32>
    %9 = arith.minimumf %5, %8 : vector<8x32xf32>
    %10 = math.exp %9 : vector<8x32xf32>
    %cst_7 = arith.constant 1.000000e+00 : f32
    %11 = vector.broadcast %cst_7 : f32 to vector<8x32xf32>
    %12 = arith.subf %10, %11 : vector<8x32xf32>
    %13 = arith.select %7, %5, %12 : vector<8x32xi1>, vector<8x32xf32>
    %c0_8 = arith.constant 0 : index
    %c0_9 = arith.constant 0 : index
    %14 = vector.load %arg4[%c0_8, %c0_9] : memref<32x32xf32, #tpu.memory_space<vmem>>, vector<32x32xf32>
    %cst_10 = arith.constant dense<0.000000e+00> : vector<8x32xf32>
    %15 = tpu.matmul %13, %14, %cst_10 {dimension_numbers = #tpu.dot_dimension_numbers<[1], [0], [0], [1], [0, 0, 1, 1], [], []>} : vector<8x32xf32>, vector<32x32xf32>, vector<8x32xf32> -> vector<8x32xf32>
    %c0_11 = arith.constant 0 : index
    %c0_12 = arith.constant 0 : index
    %16 = vector.load %arg5[%c0_11, %c0_12] : memref<1x32xf32, #tpu.memory_space<vmem>>, vector<1x32xf32>
    %17 = vector.broadcast %16 : vector<1x32xf32> to vector<8x32xf32>
    %18 = arith.addf %15, %17 : vector<8x32xf32>
    %cst_13 = arith.constant 0.000000e+00 : f32
    %19 = vector.broadcast %cst_13 : f32 to vector<8x32xf32>
    %20 = arith.cmpf ogt, %18, %19 : vector<8x32xf32>
    %cst_14 = arith.constant 0.000000e+00 : f32
    %21 = vector.broadcast %cst_14 : f32 to vector<8x32xf32>
    %22 = arith.minimumf %18, %21 : vector<8x32xf32>
    %23 = math.exp %22 : vector<8x32xf32>
    %cst_15 = arith.constant 1.000000e+00 : f32
    %24 = vector.broadcast %cst_15 : f32 to vector<8x32xf32>
    %25 = arith.subf %23, %24 : vector<8x32xf32>
    %26 = arith.select %20, %18, %25 : vector<8x32xi1>, vector<8x32xf32>
    %c0_16 = arith.constant 0 : index
    %c0_17 = arith.constant 0 : index
    %27 = vector.load %arg6[%c0_16, %c0_17] : memref<32x128xf32, #tpu.memory_space<vmem>>, vector<32x128xf32>
    %cst_18 = arith.constant dense<0.000000e+00> : vector<8x128xf32>
    %28 = tpu.matmul %26, %27, %cst_18 {dimension_numbers = #tpu.dot_dimension_numbers<[1], [0], [0], [1], [0, 0, 1, 1], [], []>} : vector<8x32xf32>, vector<32x128xf32>, vector<8x128xf32> -> vector<8x128xf32>
    %c0_19 = arith.constant 0 : index
    %c0_20 = arith.constant 0 : index
    %29 = vector.load %arg7[%c0_19, %c0_20] : memref<1x128xf32, #tpu.memory_space<vmem>>, vector<1x128xf32>
    %30 = vector.broadcast %29 : vector<1x128xf32> to vector<8x128xf32>
    %31 = arith.addf %28, %30 : vector<8x128xf32>
    %32 = tpu.iota {dimensions = array<i32: 1>} : vector<8x128xi32>
    %cst_21 = arith.constant dense<0xFF800000> : vector<8xf32>
    %33 = vector.multi_reduction <maximumf>, %31, %cst_21 [1] : vector<8x128xf32> to vector<8xf32>
    %34 = vector.shape_cast %33 : vector<8xf32> to vector<8x1xf32>
    %35 = vector.broadcast %34 : vector<8x1xf32> to vector<8x128xf32>
    %36 = arith.cmpf oeq, %31, %35 : vector<8x128xf32>
    %c128_i32 = arith.constant 128 : i32
    %37 = vector.broadcast %c128_i32 : i32 to vector<8x128xi32>
    %38 = arith.select %36, %32, %37 : vector<8x128xi1>, vector<8x128xi32>
    %cst_22 = arith.constant dense<2147483647> : vector<8xi32>
    %39 = vector.multi_reduction <minsi>, %38, %cst_22 [1] : vector<8x128xi32> to vector<8xi32>
    %40 = vector.shape_cast %39 : vector<8xi32> to vector<8x1xi32>
    %41 = vector.shape_cast %34 : vector<8x1xf32> to vector<1x8xf32>
    %c0_23 = arith.constant 0 : index
    %c0_24 = arith.constant 0 : index
    %42 = vector.load %arg8[%c0_23, %c0_24] : memref<1x8xf32, #tpu.memory_space<vmem>>, vector<1x8xf32>
    tpu.vector_store %arg8[%c0_23, %c0_24], %41 {strides = array<i32>} : memref<1x8xf32, #tpu.memory_space<vmem>>, vector<1x8xf32>,
    %43 = vector.shape_cast %40 : vector<8x1xi32> to vector<1x8xi32>
    %c0_25 = arith.constant 0 : index
    %c0_26 = arith.constant 0 : index
    %44 = vector.load %arg9[%c0_25, %c0_26] : memref<1x8xi32, #tpu.memory_space<vmem>>, vector<1x8xi32>
    tpu.vector_store %arg9[%c0_25, %c0_26], %43 {strides = array<i32>} : memref<1x8xi32, #tpu.memory_space<vmem>>, vector<1x8xi32>,
    return
  }
  func.func @transform_0(%arg0: i32) -> (i32, i32) {
    %c0_i32 = arith.constant 0 : i32
    %c0_i32_0 = arith.constant 0 : i32
    return %arg0, %c0_i32 : i32, i32
  }
  func.func @transform_1(%arg0: i32) -> (i32, i32) {
    %c0_i32 = arith.constant 0 : i32
    %c0_i32_0 = arith.constant 0 : i32
    %c0_i32_1 = arith.constant 0 : i32
    return %c0_i32, %c0_i32_0 : i32, i32
  }
  func.func @transform_2(%arg0: i32) -> (i32, i32) {
    %c0_i32 = arith.constant 0 : i32
    %c0_i32_0 = arith.constant 0 : i32
    %c0_i32_1 = arith.constant 0 : i32
    return %c0_i32, %c0_i32_0 : i32, i32
  }
  func.func @transform_3(%arg0: i32) -> (i32, i32) {
    %c0_i32 = arith.constant 0 : i32
    %c0_i32_0 = arith.constant 0 : i32
    %c0_i32_1 = arith.constant 0 : i32
    return %c0_i32, %c0_i32_0 : i32, i32
  }
  func.func @transform_4(%arg0: i32) -> (i32, i32) {
    %c0_i32 = arith.constant 0 : i32
    %c0_i32_0 = arith.constant 0 : i32
    %c0_i32_1 = arith.constant 0 : i32
    return %c0_i32, %c0_i32_0 : i32, i32
  }
  func.func @transform_5(%arg0: i32) -> (i32, i32) {
    %c0_i32 = arith.constant 0 : i32
    %c0_i32_0 = arith.constant 0 : i32
    %c0_i32_1 = arith.constant 0 : i32
    return %c0_i32, %c0_i32_0 : i32, i32
  }
  func.func @transform_6(%arg0: i32) -> (i32, i32) {
    %c0_i32 = arith.constant 0 : i32
    %c0_i32_0 = arith.constant 0 : i32
    %c0_i32_1 = arith.constant 0 : i32
    return %c0_i32, %c0_i32_0 : i32, i32
  }
  func.func @transform_7(%arg0: i32) -> (i32, i32) {
    %c0_i32 = arith.constant 0 : i32
    %c0_i32_0 = arith.constant 0 : i32
    return %arg0, %c0_i32 : i32, i32
  }
  func.func @transform_8(%arg0: i32) -> (i32, i32) {
    %c0_i32 = arith.constant 0 : i32
    %c0_i32_0 = arith.constant 0 : i32
    return %arg0, %c0_i32 : i32, i32
  }
}

</mosaic_0001>

<llo_original>
// kernel: policy_forward.1
$region0: #{policy_forward.1}
  #allocation0 [shape = 'u32[]', space=smem, size = 0x4, offset = 0x4, fixed_abs, tag = 'smem constant byte address 0x4 - core index']
  #allocation1 [shape = 'u32[144,128]{1,0:T(1,128)}', space=vmem, size = 0x12000, scoped, tag = 'internal scratch']
  %s0 = inlined_call_operand.hbm [shape: f32[2,16], index: 0, kind: input, shape index: {}]
  %s1 = inlined_call_operand.hbm [shape: f32[16,32], index: 1, kind: input, shape index: {}]
  %s2 = inlined_call_operand.vmem [shape: f32[1,32], index: 2, kind: input, shape index: {}]
  %s3 = inlined_call_operand.hbm [shape: f32[32,32], index: 3, kind: input, shape index: {}]
  %s4 = inlined_call_operand.vmem [shape: f32[1,32], index: 4, kind: input, shape index: {}]
  %s5 = inlined_call_operand.hbm [shape: f32[32,128], index: 5, kind: input, shape index: {}]
  %s6 = inlined_call_operand.vmem [shape: f32[1,128], index: 6, kind: input, shape index: {}]
  %s7 = inlined_call_operand.vmem [shape: f32[1,8], index: 7, kind: output, shape index: {0}]
  %s8 = inlined_call_operand.vmem [shape: s32[1,8], index: 8, kind: output, shape index: {1}]
  %9 = xla_tuple %s7, %s8
  %s10 = sld [smem:[#allocation0]]
  $region62: #{policy_forward.1} parent=0
    _
  %s12 = ssub.s32 1, %s10
  %s13 = scalar_select 0, %s12, %s10
  $region1: #{policy_forward.1} parent=0
    #allocation2 [shape = 'u8[4096]{0}', space=vmem, size = 0x1000, scoped, tag = 'input window, operand 0, single buffered']
    #allocation3 [shape = 's32[1]{0}', space=sflag, size = 0x4, scoped, tag = 'scoped memory for policy_forward.1']
    #allocation4 [shape = 'u8[8192]{0}', space=vmem, size = 0x2000, scoped, tag = 'input window, operand 1, single buffered']
    #allocation5 [shape = 's32[1]{0}', space=sflag, size = 0x4, scoped, tag = 'scoped memory for policy_forward.1']
    #allocation6 [shape = 'u8[16384]{0}', space=vmem, size = 0x4000, scoped, tag = 'input window, operand 3, single buffered']
    #allocation7 [shape = 'u8[16384]{0}', space=vmem, size = 0x4000, scoped, tag = 'input window, operand 5, single buffered']
    #allocation8 [shape = 's32[1]{0}', space=sflag, size = 0x4, scoped, tag = 'scoped memory for policy_forward.1']
    %14 = vsyncpa [#allocation3], 0
    %15 = vsyncpa [#allocation5], 0
    %16 = vsyncpa [#allocation8], 0
    // Predicated region
    $region2: #{policy_forward.1} parent=1 // pred_check
      _
    $region3: #{policy_forward.1} parent=1 // pred_check_branch
      %18 = sbr.rel (0) target = $region5
    $region4: #{policy_forward.1} parent=1 // pred_region
      %s20 = ssub.s32 128, 32
      %21 = vsyncadd [#allocation3], %s20
      %s22 = sshll.u32 [#allocation2], 4
      %s23 = int_to_ptr.vmem [resolvable:$true] %s22
      %28 = dma.hbm_to_vmem [thread:$0]  %s0, 32, %s23, [#allocation3], 32, 32, 2
    $region5: #{policy_forward.1} parent=1 // pred_fallthru
      _
    // Predicated region
    $region6: #{policy_forward.1} parent=1 // pred_check
      _
    $region7: #{policy_forward.1} parent=1 // pred_check_branch
      %30 = sbr.rel (0) target = $region9
    $region8: #{policy_forward.1} parent=1 // pred_region
      %s32 = ssub.s32 256, 256
      %33 = vsyncadd [#allocation5], %s32
      %s34 = sshll.u32 [#allocation4], 4
      %s35 = int_to_ptr.vmem [resolvable:$true] %s34
      %40 = dma.hbm_to_vmem [thread:$0]  %s1, 256, %s35, [#allocation5], 128, 128, 8
    $region9: #{policy_forward.1} parent=1 // pred_fallthru
      _
    // Predicated region
    $region10: #{policy_forward.1} parent=1 // pred_check
      _
    $region11: #{policy_forward.1} parent=1 // pred_check_branch
      %42 = sbr.rel (0) target = $region13
    $region12: #{policy_forward.1} parent=1 // pred_region
      _
    $region13: #{policy_forward.1} parent=1 // pred_fallthru
      _
    // Predicated region
    $region14: #{policy_forward.1} parent=1 // pred_check
      _
    $region15: #{policy_forward.1} parent=1 // pred_check_branch
      %44 = sbr.rel (0) target = $region17
    $region16: #{policy_forward.1} parent=1 // pred_region
      %s46 = ssub.s32 512, 512
      %47 = vsyncadd [#allocation5], %s46
      %s48 = sshll.u32 [#allocation6], 4
      %s49 = int_to_ptr.vmem [resolvable:$true] %s48
      %54 = dma.hbm_to_vmem [thread:$0]  %s3, 512, %s49, [#allocation5], 128, 128, 8
    $region17: #{policy_forward.1} parent=1 // pred_fallthru
      _
    // Predicated region
    $region18: #{policy_forward.1} parent=1 // pred_check
      _
    $region19: #{policy_forward.1} parent=1 // pred_check_branch
      %56 = sbr.rel (0) target = $region21
    $region20: #{policy_forward.1} parent=1 // pred_region
      _
    $region21: #{policy_forward.1} parent=1 // pred_fallthru
      _
    // Predicated region
    $region22: #{policy_forward.1} parent=1 // pred_check
      _
    $region23: #{policy_forward.1} parent=1 // pred_check_branch
      %58 = sbr.rel (0) target = $region25
    $region24: #{policy_forward.1} parent=1 // pred_region
      %s60 = ssub.s32 512, 512
      %61 = vsyncadd [#allocation8], %s60
      %s62 = sshll.u32 [#allocation7], 4
      %s63 = int_to_ptr.vmem [resolvable:$true] %s62
      %68 = dma.hbm_to_vmem [thread:$0]  %s5, 512, %s63, [#allocation8], 128, 128, 8
    $region25: #{policy_forward.1} parent=1 // pred_fallthru
      _
    // Predicated region
    $region26: #{policy_forward.1} parent=1 // pred_check
      _
    $region27: #{policy_forward.1} parent=1 // pred_check_branch
      %70 = sbr.rel (0) target = $region29
    $region28: #{policy_forward.1} parent=1 // pred_region
      _
    $region29: #{policy_forward.1} parent=1 // pred_fallthru
      _
    // Predicated region
    $region30: #{policy_forward.1} parent=1 // pred_check
      _
    $region31: #{policy_forward.1} parent=1 // pred_check_branch
      %72 = sbr.rel (0) target = $region33
    $region32: #{policy_forward.1} parent=1 // pred_region
      %73 = dma.done [#allocation3], 128
    $region33: #{policy_forward.1} parent=1 // pred_fallthru
      _
    // Predicated region
    $region34: #{policy_forward.1} parent=1 // pred_check
      _
    $region35: #{policy_forward.1} parent=1 // pred_check_branch
      %75 = sbr.rel (0) target = $region37
    $region36: #{policy_forward.1} parent=1 // pred_region
      %76 = dma.done [#allocation5], 256
    $region37: #{policy_forward.1} parent=1 // pred_fallthru
      _
    // Predicated region
    $region38: #{policy_forward.1} parent=1 // pred_check
      _
    $region39: #{policy_forward.1} parent=1 // pred_check_branch
      %78 = sbr.rel (0) target = $region41
    $region40: #{policy_forward.1} parent=1 // pred_region
      %79 = dma.done [#allocation5], 512
    $region41: #{policy_forward.1} parent=1 // pred_fallthru
      _
    // Predicated region
    $region42: #{policy_forward.1} parent=1 // pred_check
      _
    $region43: #{policy_forward.1} parent=1 // pred_check_branch
      %81 = sbr.rel (0) target = $region45
    $region44: #{policy_forward.1} parent=1 // pred_region
      %82 = dma.done [#allocation8], 512
    $region45: #{policy_forward.1} parent=1 // pred_fallthru
      _
    %v83 = vld [vmem:[#allocation2] sm:$0xff]
    %v84 = vld [vmem:[#allocation4] sm:$0xff]
    %v85 = vld [vmem:[#allocation4 + $0x8] sm:$0xff]
    %v86 = vld [vmem:[%s2] sm:$0x1]
    %v88 = vlaneseq
    %v89 = vshrl.u32 %v88, 7
    %v90 = vsub.s32 0, %v89
    %v91 = vrot.slane %v86, %v90
    %vm93 = vcmask 130048
    %v95 = vsel %vm93, %v83, 0
    %97 = vmatprep.subr.mxu0 0.0
    %98 = vmatpush1.msra.mxu0 %v84
    %99 = vmatprep.subr.mxu0 0.0
    %100 = vmatpush1.msra.mxu0 %v85
    %101 = vmatprep.subr.mxu0 0.0
    %102 = vmatpush1.msra.mxu0 0.0
    %103 = vmatprep.subr.mxu0 0.0
    %104 = vmatpush1.msra.mxu0 0.0
    %105 = vmatprep.subr.mxu0 0.0
    %106 = vmatpush1.msra.mxu0 0.0
    %107 = vmatprep.subr.mxu0 0.0
    %108 = vmatpush1.msra.mxu0 0.0
    %109 = vmatprep.subr.mxu0 0.0
    %110 = vmatpush1.msra.mxu0 0.0
    %111 = vmatprep.subr.mxu0 0.0
    %112 = vmatpush1.msra.mxu0 0.0
    %113 = vmatprep.subr.mxu0 0.0
    %114 = vmatpush1.msra.mxu0 0.0
    %115 = vmatprep.subr.mxu0 0.0
    %116 = vmatpush1.msra.mxu0 0.0
    %117 = vmatprep.subr.mxu0 0.0
    %118 = vmatpush1.msra.mxu0 0.0
    %119 = vmatprep.subr.mxu0 0.0
    %120 = vmatpush1.msra.mxu0 0.0
    %121 = vmatprep.subr.mxu0 0.0
    %122 = vmatpush1.msra.mxu0 0.0
    %123 = vmatprep.subr.mxu0 0.0
    %124 = vmatpush1.msra.mxu0 0.0
    %125 = vmatprep.subr.mxu0 0.0
    %126 = vmatpush1.msra.mxu0 0.0
    %127 = vmatprep.subr.mxu0 0.0
    %128 = vmatpush1.msra.mxu0 0.0
    %129 = vmatprep.subr.mxu0 0.0
    %130 = vmatpush1.msra.mxu0 0.0
    %131 = vmatprep.subr.mxu0 0.0
    %132 = vmatpush1.msra.mxu0 0.0
    %133 = vmatprep.subr.mxu0 0.0
    %134 = vmatpush1.msra.mxu0 0.0
    %135 = vmatprep.subr.mxu0 0.0
    %136 = vmatpush1.msra.mxu0 0.0
    %137 = vmatprep.subr.mxu0 0.0
    %138 = vmatpush1.msra.mxu0 0.0
    %139 = vmatprep.subr.mxu0 0.0
    %140 = vmatpush1.msra.mxu0 0.0
    %141 = vmatprep.subr.mxu0 0.0
    %142 = vmatpush1.msra.mxu0 0.0
    %143 = vmatprep.subr.mxu0 0.0
    %144 = vmatpush1.msra.mxu0 0.0
    %145 = vmatprep.subr.mxu0 0.0
    %146 = vmatpush1.msra.mxu0 0.0
    %147 = vmatprep.subr.mxu0 0.0
    %148 = vmatpush1.msra.mxu0 0.0
    %149 = vmatprep.subr.mxu0 0.0
    %150 = vmatpush1.msra.mxu0 0.0
    %151 = vmatprep.subr.mxu0 0.0
    %152 = vmatpush1.msra.mxu0 0.0
    %153 = vmatprep.subr.mxu0 0.0
    %154 = vmatpush1.msra.mxu0 0.0
    %155 = vmatprep.subr.mxu0 0.0
    %156 = vmatpush1.msra.mxu0 0.0
    %157 = vmatprep.subr.mxu0 0.0
    %158 = vmatpush1.msra.mxu0 0.0
    %159 = vmatprep.subr.mxu0 0.0
    %160 = vmatpush1.msra.mxu0 0.0
    %161 = vmatprep.mubr.f32.mxu0 0.0
    %162 = vmatmul.mubr.f32.gmra.mrb[0].mxu0 %v95
    %v163 = vpop.f32.mrb[0].mxu0
    %v164 = vadd.f32 %v91, %v163
    %v165 = vpop.f32.mrb[0].mxu0
    %166 = vdwg.mxu0
    %vm167 = vcmp.gt.f32.partialorder %v164, 0.0
    %v168 = vmin.f32 %v164, 0.0
    %v169 = vmul.f32 %v168, 1.442695
    %v170 = vpow.pop %v169
    %v171 = vsub.f32 %v170, 1.0
    %v172 = vsel %vm167, %v164, %v171
    %v173 = vld [vmem:[#allocation6] sm:$0xff]
    %v174 = vld [vmem:[#allocation6 + $0x8] sm:$0xff]
    %v175 = vld [vmem:[#allocation6 + $0x10] sm:$0xff]
    %v176 = vld [vmem:[#allocation6 + $0x18] sm:$0xff]
    %v177 = vld [vmem:[%s4] sm:$0x1]
    %v179 = vlaneseq
    %v180 = vshrl.u32 %v179, 7
    %v181 = vsub.s32 0, %v180
    %v182 = vrot.slane %v177, %v181
    %vm184 = vcmask 261120
    %v186 = vsel %vm184, %v172, 0
    %188 = vmatprep.subr.mxu0 0.0
    %189 = vmatpush1.msra.mxu0 %v173
    %190 = vmatprep.subr.mxu0 0.0
    %191 = vmatpush1.msra.mxu0 %v174
    %192 = vmatprep.subr.mxu0 0.0
    %193 = vmatpush1.msra.mxu0 %v175
    %194 = vmatprep.subr.mxu0 0.0
    %195 = vmatpush1.msra.mxu0 %v176
    %196 = vmatprep.subr.mxu0 0.0
    %197 = vmatpush1.msra.mxu0 0.0
    %198 = vmatprep.subr.mxu0 0.0
    %199 = vmatpush1.msra.mxu0 0.0
    %200 = vmatprep.subr.mxu0 0.0
    %201 = vmatpush1.msra.mxu0 0.0
    %202 = vmatprep.subr.mxu0 0.0
    %203 = vmatpush1.msra.mxu0 0.0
    %204 = vmatprep.subr.mxu0 0.0
    %205 = vmatpush1.msra.mxu0 0.0
    %206 = vmatprep.subr.mxu0 0.0
    %207 = vmatpush1.msra.mxu0 0.0
    %208 = vmatprep.subr.mxu0 0.0
    %209 = vmatpush1.msra.mxu0 0.0
    %210 = vmatprep.subr.mxu0 0.0
    %211 = vmatpush1.msra.mxu0 0.0
    %212 = vmatprep.subr.mxu0 0.0
    %213 = vmatpush1.msra.mxu0 0.0
    %214 = vmatprep.subr.mxu0 0.0
    %215 = vmatpush1.msra.mxu0 0.0
    %216 = vmatprep.subr.mxu0 0.0
    %217 = vmatpush1.msra.mxu0 0.0
    %218 = vmatprep.subr.mxu0 0.0
    %219 = vmatpush1.msra.mxu0 0.0
    %220 = vmatprep.subr.mxu0 0.0
    %221 = vmatpush1.msra.mxu0 0.0
    %222 = vmatprep.subr.mxu0 0.0
    %223 = vmatpush1.msra.mxu0 0.0
    %224 = vmatprep.subr.mxu0 0.0
    %225 = vmatpush1.msra.mxu0 0.0
    %226 = vmatprep.subr.mxu0 0.0
    %227 = vmatpush1.msra.mxu0 0.0
    %228 = vmatprep.subr.mxu0 0.0
    %229 = vmatpush1.msra.mxu0 0.0
    %230 = vmatprep.subr.mxu0 0.0
    %231 = vmatpush1.msra.mxu0 0.0
    %232 = vmatprep.subr.mxu0 0.0
    %233 = vmatpush1.msra.mxu0 0.0
    %234 = vmatprep.subr.mxu0 0.0
    %235 = vmatpush1.msra.mxu0 0.0
    %236 = vmatprep.subr.mxu0 0.0
    %237 = vmatpush1.msra.mxu0 0.0
    %238 = vmatprep.subr.mxu0 0.0
    %239 = vmatpush1.msra.mxu0 0.0
    %240 = vmatprep.subr.mxu0 0.0
    %241 = vmatpush1.msra.mxu0 0.0
    %242 = vmatprep.subr.mxu0 0.0
    %243 = vmatpush1.msra.mxu0 0.0
    %244 = vmatprep.subr.mxu0 0.0
    %245 = vmatpush1.msra.mxu0 0.0
    %246 = vmatprep.subr.mxu0 0.0
    %247 = vmatpush1.msra.mxu0 0.0
    %248 = vmatprep.subr.mxu0 0.0
    %249 = vmatpush1.msra.mxu0 0.0
    %250 = vmatprep.subr.mxu0 0.0
    %251 = vmatpush1.msra.mxu0 0.0
    %252 = vmatprep.mubr.f32.mxu0 0.0
    %253 = vmatmul.mubr.f32.gmra.mrb[0].mxu0 %v186
    %v254 = vpop.f32.mrb[0].mxu0
    %v255 = vadd.f32 %v182, %v254
    %v256 = vpop.f32.mrb[0].mxu0
    %257 = vdwg.mxu0
    %vm258 = vcmp.gt.f32.partialorder %v255, 0.0
    %v259 = vmin.f32 %v255, 0.0
    %v260 = vmul.f32 %v259, 1.442695
    %v261 = vpow.pop %v260
    %v262 = vsub.f32 %v261, 1.0
    %v263 = vsel %vm258, %v255, %v262
    %v264 = vld [vmem:[#allocation7] sm:$0xff]
    %v265 = vld [vmem:[#allocation7 + $0x8] sm:$0xff]
    %v266 = vld [vmem:[#allocation7 + $0x10] sm:$0xff]
    %v267 = vld [vmem:[#allocation7 + $0x18] sm:$0xff]
    %v268 = vld [vmem:[%s6] sm:$0x1]
    %v270 = vlaneseq
    %v271 = vshrl.u32 %v270, 7
    %v272 = vsub.s32 0, %v271
    %v273 = vrot.slane %v268, %v272
    %v276 = vsel %vm184, %v263, 0
    %278 = vmatprep.subr.mxu0 0.0
    %279 = vmatpush1.msra.mxu0 %v264
    %280 = vmatprep.subr.mxu0 0.0
    %281 = vmatpush1.msra.mxu0 %v265
    %282 = vmatprep.subr.mxu0 0.0
    %283 = vmatpush1.msra.mxu0 %v266
    %284 = vmatprep.subr.mxu0 0.0
    %285 = vmatpush1.msra.mxu0 %v267
    %286 = vmatprep.subr.mxu0 0.0
    %287 = vmatpush1.msra.mxu0 0.0
    %288 = vmatprep.subr.mxu0 0.0
    %289 = vmatpush1.msra.mxu0 0.0
    %290 = vmatprep.subr.mxu0 0.0
    %291 = vmatpush1.msra.mxu0 0.0
    %292 = vmatprep.subr.mxu0 0.0
    %293 = vmatpush1.msra.mxu0 0.0
    %294 = vmatprep.subr.mxu0 0.0
    %295 = vmatpush1.msra.mxu0 0.0
    %296 = vmatprep.subr.mxu0 0.0
    %297 = vmatpush1.msra.mxu0 0.0
    %298 = vmatprep.subr.mxu0 0.0
    %299 = vmatpush1.msra.mxu0 0.0
    %300 = vmatprep.subr.mxu0 0.0
    %301 = vmatpush1.msra.mxu0 0.0
    %302 = vmatprep.subr.mxu0 0.0
    %303 = vmatpush1.msra.mxu0 0.0
    %304 = vmatprep.subr.mxu0 0.0
    %305 = vmatpush1.msra.mxu0 0.0
    %306 = vmatprep.subr.mxu0 0.0
    %307 = vmatpush1.msra.mxu0 0.0
    %308 = vmatprep.subr.mxu0 0.0
    %309 = vmatpush1.msra.mxu0 0.0
    %310 = vmatprep.subr.mxu0 0.0
    %311 = vmatpush1.msra.mxu0 0.0
    %312 = vmatprep.subr.mxu0 0.0
    %313 = vmatpush1.msra.mxu0 0.0
    %314 = vmatprep.subr.mxu0 0.0
    %315 = vmatpush1.msra.mxu0 0.0
    %316 = vmatprep.subr.mxu0 0.0
    %317 = vmatpush1.msra.mxu0 0.0
    %318 = vmatprep.subr.mxu0 0.0
    %319 = vmatpush1.msra.mxu0 0.0
    %320 = vmatprep.subr.mxu0 0.0
    %321 = vmatpush1.msra.mxu0 0.0
    %322 = vmatprep.subr.mxu0 0.0
    %323 = vmatpush1.msra.mxu0 0.0
    %324 = vmatprep.subr.mxu0 0.0
    %325 = vmatpush1.msra.mxu0 0.0
    %326 = vmatprep.subr.mxu0 0.0
    %327 = vmatpush1.msra.mxu0 0.0
    %328 = vmatprep.subr.mxu0 0.0
    %329 = vmatpush1.msra.mxu0 0.0
    %330 = vmatprep.subr.mxu0 0.0
    %331 = vmatpush1.msra.mxu0 0.0
    %332 = vmatprep.subr.mxu0 0.0
    %333 = vmatpush1.msra.mxu0 0.0
    %334 = vmatprep.subr.mxu0 0.0
    %335 = vmatpush1.msra.mxu0 0.0
    %336 = vmatprep.subr.mxu0 0.0
    %337 = vmatpush1.msra.mxu0 0.0
    %338 = vmatprep.subr.mxu0 0.0
    %339 = vmatpush1.msra.mxu0 0.0
    %340 = vmatprep.subr.mxu0 0.0
    %341 = vmatpush1.msra.mxu0 0.0
    %342 = vmatprep.mubr.f32.mxu0 0.0
    %343 = vmatmul.mubr.f32.gmra.mrb[0].mxu0 %v276
    %v344 = vpop.f32.mrb[0].mxu0
    %v345 = vadd.f32 %v273, %v344
    %v346 = vpop.f32.mrb[0].mxu0
    %347 = vdwg.mxu0
    %v348 = vlaneseq
    %v349 = vand.u32 %v348, 127
    %350 = vmax.xlane.f32.xlu0 %v345
    %v351 = vpop.xlane.xlu0 %350
    %vm352 = vcmp.eq.f32.partialorder %v345, %v351
    %v353 = vsel %vm352, %v349, 128
    %v354 = vand.u32 %v353, 65535
    %v355 = vshra.s32 %v353, 16
    %v356 = vcvt.s32.f32 %v354
    %v357 = vcvt.s32.f32 %v355
    %358 = vmin.xlane.f32.xlu0 %v357
    %v359 = vpop.xlane.xlu0 %358
    %vm360 = vcmp.eq.f32.partialorder %v357, %v359
    %v361 = vsel %vm360, %v356, inf
    %362 = vmin.xlane.f32.xlu0 %v361
    %v363 = vpop.xlane.xlu0 %362
    %v364 = vcvt.f32.s32 %v363
    %v365 = vcvt.f32.s32 %v359
    %v366 = vshll.u32 %v365, 16
    %v367 = vadd.s32 %v366, %v364
    %v369 = vlaneseq
    %v370 = vshrl.u32 %v369, 7
    %v371 = vsub.s32 %v349, %v370
    %v372 = vrot.slane %v351, %v371
    %vm374 = vcmask 57344
    %375 = vst.msk [vmem:[%s7] sm:$0x1] %vm374, %v372
    %v376 = vlaneseq
    %v377 = vshrl.u32 %v376, 7
    %v378 = vsub.s32 %v349, %v377
    %v379 = vrot.slane %v367, %v378
    %380 = vst.msk [vmem:[%s8] sm:$0x1] %vm374, %v379
    // Predicated region
    $region46: #{policy_forward.1} parent=1 // pred_check
      _
    $region47: #{policy_forward.1} parent=1 // pred_check_branch
      %382 = sbr.rel (0) target = $region49
    $region48: #{policy_forward.1} parent=1 // pred_region
      _
    $region49: #{policy_forward.1} parent=1 // pred_fallthru
      _
    // Predicated region
    $region50: #{policy_forward.1} parent=1 // pred_check
      _
    $region51: #{policy_forward.1} parent=1 // pred_check_branch
      %384 = sbr.rel (0) target = $region53
    $region52: #{policy_forward.1} parent=1 // pred_region
      _
    $region53: #{policy_forward.1} parent=1 // pred_fallthru
      _
    // Predicated region
    $region54: #{policy_forward.1} parent=1 // pred_check
      _
    $region55: #{policy_forward.1} parent=1 // pred_check_branch
      %386 = sbr.rel (0) target = $region57
    $region56: #{policy_forward.1} parent=1 // pred_region
      _
    $region57: #{policy_forward.1} parent=1 // pred_fallthru
      _
    // Predicated region
    $region58: #{policy_forward.1} parent=1 // pred_check
      _
    $region59: #{policy_forward.1} parent=1 // pred_check_branch
      %388 = sbr.rel (0) target = $region61
    $region60: #{policy_forward.1} parent=1 // pred_region
      _
    $region61: #{policy_forward.1} parent=1 // pred_fallthru
      _
    %389 = vsyncpa [#allocation3], 1
    %390 = vsyncpa [#allocation5], 1
    %391 = vsyncpa [#allocation8], 1

</llo_original>
